<compile_context>
chip_gen: v5e
topology: v5e:2x2
jax: 0.10.0
libtpu: 0.0.40
codegen_flags: <defaults>
</compile_context>

<pallas_src>
import functools

import jax
import jax.numpy as jnp
from jax.experimental import pallas as pl
from jax.experimental.pallas import tpu as pltpu

EPSILON = 1e-6


def _round_down(x, m):
    return (x // m) * m


def _dsc_kernel_rows(pred_ref, targ_ref, inter_ref, sum_ref, *,
                     rows, tr, chunks_per_core, has_partial):
    """Sublane-dense path.

    pred_ref/targ_ref : (B, TR, 128) VMEM tiles (native dtype, cast to f32 here)
    inter_ref/sum_ref : (B, 128) per-core lane-partial outputs (VMEM-resident
                        across the reduction axis -> used directly as the
                        accumulators, written back once per core)
    """
    c = pl.program_id(0)          # core / chunk-split axis ("parallel")
    k = pl.program_id(1)          # reduction axis ("arbitrary")

    @pl.when(k == 0)
    def _():
        inter_ref[...] = jnp.zeros_like(inter_ref)
        sum_ref[...] = jnp.zeros_like(sum_ref)

    p = pred_ref[...].astype(jnp.float32)
    t = targ_ref[...].astype(jnp.float32)

    def accumulate(pp, tt):
        # Lane-partial accumulation: reduce only over the row (sublane) axis,
        # keep the 128 lanes.  Inner loop is essentially vreg adds that hide
        # under the input DMA; the 128->1 reduce happens in the JAX epilogue.
        inter_ref[...] += jnp.sum(pp * tt, axis=1)
        sum_ref[...] += jnp.sum(pp + tt, axis=1)

    if has_partial:
        # Static: only emitted when a partial/dummy step can actually occur.
        start = (c * chunks_per_core + k) * tr
        is_partial = start + tr > rows

        @pl.when(jnp.logical_not(is_partial))
        def _():
            accumulate(p, t)

        @pl.when(is_partial)
        def _():
            # Boundary block of the row axis, or a dummy step of an uneven
            # 2-core split (start >= rows -> keep nothing).  Mask BOTH
            # operands before the multiply so OOB garbage never reaches the
            # arithmetic.
            row = jax.lax.broadcasted_iota(jnp.int32, p.shape, 1)
            keep = row < (rows - start)
            zero = jnp.zeros_like(p)
            accumulate(jnp.where(keep, p, zero), jnp.where(keep, t, zero))
    else:
        accumulate(p, t)


def _dsc_kernel_flat(pred_ref, targ_ref, inter_ref, sum_ref, *,
                     n, tn, has_partial):
    """Fallback for flattened lengths that are not 128-lane aligned (no pad).

    pred_ref/targ_ref : (B, TN) VMEM tiles; inter_ref/sum_ref : (B, 1) outputs.
    """
    k = pl.program_id(0)

    @pl.when(k == 0)
    def _():
        inter_ref[...] = jnp.zeros_like(inter_ref)
        sum_ref[...] = jnp.zeros_like(sum_ref)

    p = pred_ref[...].astype(jnp.float32)
    t = targ_ref[...].astype(jnp.float32)

    def accumulate(pp, tt):
        inter_ref[...] += jnp.sum(pp * tt, axis=1, keepdims=True)
        sum_ref[...] += jnp.sum(pp + tt, axis=1, keepdims=True)

    if has_partial:
        is_tail = k == pl.num_programs(0) - 1

        @pl.when(jnp.logical_not(is_tail))
        def _():
            accumulate(p, t)

        @pl.when(is_tail)
        def _():
            lane = jax.lax.broadcasted_iota(jnp.int32, p.shape, 1)
            keep = lane < (n - k * tn)
            zero = jnp.zeros_like(p)
            accumulate(jnp.where(keep, p, zero), jnp.where(keep, t, zero))
    else:
        accumulate(p, t)


@functools.partial(jax.jit,
                   static_argnames=("max_rows_per_step", "target_step_bytes"))
def dsc_loss(pred, target, max_rows_per_step: int = 0,
             target_step_bytes: int = 8 * 1024 * 1024):
    """Equivalent of DSC_loss().forward(pred, target) from the PyTorch module."""
    assert pred.shape == target.shape
    batch = pred.shape[0]
    n = 1
    for d in pred.shape[1:]:
        n *= d

    in_bytes = jnp.dtype(pred.dtype).itemsize + jnp.dtype(target.dtype).itemsize

    if n % 128 == 0:
        # ---- main path: free metadata reshape to a sublane-dense layout ----
        rows = n // 128
        p = pred.reshape(batch, rows, 128)
        t = target.reshape(batch, rows, 128)

        # Double-buffered input footprint is exactly
        # 2 * batch * tr * 128 * in_bytes on this layout (no sublane padding).
        per_row_bytes = batch * 128 * in_bytes
        tr = max(16, _round_down(max(1, target_step_bytes // per_row_bytes), 16))
        if max_rows_per_step:
            tr = max(16, min(tr, _round_down(max_rows_per_step, 16)))
        if tr >= rows:
            tr = rows                      # single full-extent chunk

        total_chunks = pl.cdiv(rows, tr)
        ncores = 2 if total_chunks >= 2 else 1     # v7x megacore split
        cpc = pl.cdiv(total_chunks, ncores)        # chunks per core
        has_partial = (rows % tr != 0) or (total_chunks % ncores != 0)
        last_chunk = total_chunks - 1

        def in_map(c, k):
            # Clamp so a dummy step of an uneven split stays in-bounds; its
            # contribution is masked to zero inside the kernel.
            return (0, jnp.minimum(c * cpc + k, last_chunk), 0)

        kernel = functools.partial(_dsc_kernel_rows, rows=rows, tr=tr,
                                   chunks_per_core=cpc, has_partial=has_partial)
        inter_parts, sum_parts = pl.pallas_call(
            kernel,
            out_shape=(
                jax.ShapeDtypeStruct((ncores, batch, 128), jnp.float32),
                jax.ShapeDtypeStruct((ncores, batch, 128), jnp.float32),
            ),
            grid=(ncores, cpc),
            in_specs=[
                pl.BlockSpec((batch, tr, 128), in_map),
                pl.BlockSpec((batch, tr, 128), in_map),
            ],
            out_specs=(
                pl.BlockSpec((None, batch, 128), lambda c, k: (c, 0, 0)),
                pl.BlockSpec((None, batch, 128), lambda c, k: (c, 0, 0)),
            ),
            compiler_params=pltpu.CompilerParams(
                dimension_semantics=("parallel", "arbitrary"),
                vmem_limit_bytes=32 * 1024 * 1024,
            ),
            cost_estimate=pl.CostEstimate(
                flops=3 * batch * n, transcendentals=0,
                bytes_accessed=batch * n * in_bytes),
        )(p, t)

        inter = jnp.sum(inter_parts, axis=(0, 2))   # (B,)
        total = jnp.sum(sum_parts, axis=(0, 2))     # (B,)
    else:
        # ---- rare fallback: non-128-aligned length, no pad, lane-masked ----
        p = pred.reshape(batch, n)
        t = target.reshape(batch, n)
        if n < 128:
            tn = n                                   # single full-extent block
        else:
            # Account for sublane padding of a (batch, tn) tile when sizing.
            pad_rows = max(batch, 16)
            tn = max(128, _round_down((4 * 1024 * 1024) // (pad_rows * in_bytes),
                                      128))
            tn = min(tn, _round_down(n, 128))
        num_chunks = pl.cdiv(n, tn)
        has_partial = (n % tn) != 0

        kernel = functools.partial(_dsc_kernel_flat, n=n, tn=tn,
                                   has_partial=has_partial)
        inter_o, sum_o = pl.pallas_call(
            kernel,
            out_shape=(
                jax.ShapeDtypeStruct((batch, 1), jnp.float32),
                jax.ShapeDtypeStruct((batch, 1), jnp.float32),
            ),
            grid=(num_chunks,),
            in_specs=[
                pl.BlockSpec((batch, tn), lambda k: (0, k)),
                pl.BlockSpec((batch, tn), lambda k: (0, k)),
            ],
            out_specs=(
                pl.BlockSpec((batch, 1), lambda k: (0, 0)),
                pl.BlockSpec((batch, 1), lambda k: (0, 0)),
            ),
            compiler_params=pltpu.CompilerParams(
                dimension_semantics=("arbitrary",),
                vmem_limit_bytes=32 * 1024 * 1024,
            ),
        )(p, t)
        inter = inter_o[:, 0]
        total = sum_o[:, 0]

    dsc = (2.0 * inter + EPSILON) / (total + EPSILON)
    return 1.0 - jnp.sum(dsc) / float(batch)


def _reference_dsc_loss(pred, target):
    """Pure-JAX reference mirroring the PyTorch forward exactly."""
    batch = pred.shape[0]
    p = pred.reshape(batch, -1).astype(jnp.float32)
    t = target.reshape(batch, -1).astype(jnp.float32)
    dsc = (2.0 * jnp.sum(p * t, axis=1) + EPSILON) / (jnp.sum(p + t, axis=1) + EPSILON)
    return 1.0 - jnp.sum(dsc) / float(batch)


if __name__ == "__main__":
    key = jax.random.PRNGKey(0)

    def check(pred, target, **kw):
        out = jax.block_until_ready(dsc_loss(pred, target, **kw))
        ref = _reference_dsc_loss(pred, target)
        assert jnp.allclose(out, ref, rtol=1e-5, atol=1e-6), (out, ref)
        return out

    def make(k, shape, dtype=jnp.float32):
        k1, k2 = jax.random.split(k)
        pred = jax.nn.sigmoid(jax.random.normal(k1, shape, dtype=jnp.float32))
        target = (jax.random.uniform(k2, shape) > 0.5).astype(jnp.float32)
        return pred.astype(dtype), target

    # Primary case: small NCHW segmentation-style prediction / target.
    key, k = jax.random.split(key)
    pred, target = make(k, (2, 4, 16, 16))
    check(pred, target)

    # Multi-chunk path, even split across the 2-way "parallel" axis.
    key, k = jax.random.split(key)
    pred2, target2 = make(k, (2, 4, 64, 64))
    check(pred2, target2, max_rows_per_step=16)

    # Uneven 2-core split (dummy masked step on one core).
    key, k = jax.random.split(key)
    pred3, target3 = make(k, (2, 5, 32, 64))
    check(pred3, target3, max_rows_per_step=16)

    # Partial last row-chunk (boundary block on the row axis).
    key, k = jax.random.split(key)
    pred4, target4 = make(k, (2, 5, 48, 64))
    check(pred4, target4, max_rows_per_step=16)

    # Non-128-aligned flattened length: lane-masked fallback, no pad.
    key, k = jax.random.split(key)
    pred5, target5 = make(k, (2, 3, 15, 7))
    check(pred5, target5)

    # Tiny non-aligned length (< 128): single full-extent fallback block.
    key, k = jax.random.split(key)
    pred6, target6 = make(k, (2, 3, 5, 7))
    check(pred6, target6)

    # bf16 prediction streamed in its native dtype (cast to f32 in-VMEM).
    check(pred.astype(jnp.bfloat16), target)

    print("KERNEL_OK")
</pallas_src>

<mosaic_0001>
module attributes {stable_mosaic.version = 11 : i64} {
  func.func @_dsc_kernel_rows(%arg0: i32, %arg1: i32, %arg2: memref<2x8x128xf32, #tpu.memory_space<vmem>>, %arg3: memref<2x8x128xf32, #tpu.memory_space<vmem>>, %arg4: memref<1x2x128xf32, #tpu.memory_space<vmem>>, %arg5: memref<1x2x128xf32, #tpu.memory_space<vmem>>) attributes {dimension_semantics = [#tpu.dimension_semantics<parallel>, #tpu.dimension_semantics<arbitrary>], iteration_bounds = array<i64: 1, 1>, scalar_prefetch = 0 : i64, scratch_operands = 0 : i64, tpu.core_type = #tpu.core_type<tc>, window_params = [{transform_indices = @transform_0, window_bounds = array<i64: 2, 8, 128>}, {transform_indices = @transform_1, window_bounds = array<i64: 2, 8, 128>}, {transform_indices = @transform_2, window_bounds = array<i64: 1, 2, 128>}, {transform_indices = @transform_3, window_bounds = array<i64: 1, 2, 128>}]} {
    %c0_i32 = arith.constant 0 : i32
    %0 = arith.cmpi eq, %arg1, %c0_i32 : i32
    %1 = arith.extui %0 : i1 to i32
    %c0_i32_0 = arith.constant 0 : i32
    %2 = arith.cmpi ne, %1, %c0_i32_0 : i32
    scf.if %2 {
      %cst_19 = arith.constant 0.000000e+00 : f32
      %21 = vector.broadcast %cst_19 : f32 to vector<2x128xf32>
      %c0_20 = arith.constant 0 : index
      %c0_21 = arith.constant 0 : index
      %c0_22 = arith.constant 0 : index
      %22 = vector.load %arg4[%c0_20, %c0_21, %c0_22] : memref<1x2x128xf32, #tpu.memory_space<vmem>>, vector<1x2x128xf32>
      %23 = vector.shape_cast %22 : vector<1x2x128xf32> to vector<2x128xf32>
      %24 = vector.shape_cast %21 : vector<2x128xf32> to vector<1x2x128xf32>
      tpu.vector_store %arg4[%c0_20, %c0_21, %c0_22], %24 {strides = array<i32>} : memref<1x2x128xf32, #tpu.memory_space<vmem>>, vector<1x2x128xf32>,
      %cst_23 = arith.constant 0.000000e+00 : f32
      %25 = vector.broadcast %cst_23 : f32 to vector<2x128xf32>
      %c0_24 = arith.constant 0 : index
      %c0_25 = arith.constant 0 : index
      %c0_26 = arith.constant 0 : index
      %26 = vector.load %arg5[%c0_24, %c0_25, %c0_26] : memref<1x2x128xf32, #tpu.memory_space<vmem>>, vector<1x2x128xf32>
      %27 = vector.shape_cast %26 : vector<1x2x128xf32> to vector<2x128xf32>
      %28 = vector.shape_cast %25 : vector<2x128xf32> to vector<1x2x128xf32>
      tpu.vector_store %arg5[%c0_24, %c0_25, %c0_26], %28 {strides = array<i32>} : memref<1x2x128xf32, #tpu.memory_space<vmem>>, vector<1x2x128xf32>,
    } else {
    }
    %c0 = arith.constant 0 : index
    %c0_1 = arith.constant 0 : index
    %c0_2 = arith.constant 0 : index
    %3 = vector.load %arg2[%c0, %c0_1, %c0_2] : memref<2x8x128xf32, #tpu.memory_space<vmem>>, vector<2x8x128xf32>
    %c0_3 = arith.constant 0 : index
    %c0_4 = arith.constant 0 : index
    %c0_5 = arith.constant 0 : index
    %4 = vector.load %arg3[%c0_3, %c0_4, %c0_5] : memref<2x8x128xf32, #tpu.memory_space<vmem>>, vector<2x8x128xf32>
    %c0_6 = arith.constant 0 : index
    %c0_7 = arith.constant 0 : index
    %c0_8 = arith.constant 0 : index
    %5 = vector.load %arg4[%c0_6, %c0_7, %c0_8] : memref<1x2x128xf32, #tpu.memory_space<vmem>>, vector<1x2x128xf32>
    %6 = vector.shape_cast %5 : vector<1x2x128xf32> to vector<2x128xf32>
    %7 = arith.mulf %3, %4 : vector<2x8x128xf32>
    %cst = arith.constant dense<0.000000e+00> : vector<2x128xf32>
    %8 = vector.multi_reduction <add>, %7, %cst [1] : vector<2x8x128xf32> to vector<2x128xf32>
    %9 = arith.addf %6, %8 : vector<2x128xf32>
    %c0_9 = arith.constant 0 : index
    %c0_10 = arith.constant 0 : index
    %c0_11 = arith.constant 0 : index
    %10 = vector.load %arg4[%c0_9, %c0_10, %c0_11] : memref<1x2x128xf32, #tpu.memory_space<vmem>>, vector<1x2x128xf32>
    %11 = vector.shape_cast %10 : vector<1x2x128xf32> to vector<2x128xf32>
    %12 = vector.shape_cast %9 : vector<2x128xf32> to vector<1x2x128xf32>
    tpu.vector_store %arg4[%c0_9, %c0_10, %c0_11], %12 {strides = array<i32>} : memref<1x2x128xf32, #tpu.memory_space<vmem>>, vector<1x2x128xf32>,
    %c0_12 = arith.constant 0 : index
    %c0_13 = arith.constant 0 : index
    %c0_14 = arith.constant 0 : index
    %13 = vector.load %arg5[%c0_12, %c0_13, %c0_14] : memref<1x2x128xf32, #tpu.memory_space<vmem>>, vector<1x2x128xf32>
    %14 = vector.shape_cast %13 : vector<1x2x128xf32> to vector<2x128xf32>
    %15 = arith.addf %3, %4 : vector<2x8x128xf32>
    %cst_15 = arith.constant dense<0.000000e+00> : vector<2x128xf32>
    %16 = vector.multi_reduction <add>, %15, %cst_15 [1] : vector<2x8x128xf32> to vector<2x128xf32>
    %17 = arith.addf %14, %16 : vector<2x128xf32>
    %c0_16 = arith.constant 0 : index
    %c0_17 = arith.constant 0 : index
    %c0_18 = arith.constant 0 : index
    %18 = vector.load %arg5[%c0_16, %c0_17, %c0_18] : memref<1x2x128xf32, #tpu.memory_space<vmem>>, vector<1x2x128xf32>
    %19 = vector.shape_cast %18 : vector<1x2x128xf32> to vector<2x128xf32>
    %20 = vector.shape_cast %17 : vector<2x128xf32> to vector<1x2x128xf32>
    tpu.vector_store %arg5[%c0_16, %c0_17, %c0_18], %20 {strides = array<i32>} : memref<1x2x128xf32, #tpu.memory_space<vmem>>, vector<1x2x128xf32>,
    return
  }
  func.func @transform_0(%arg0: i32, %arg1: i32) -> (i32, i32, i32) {
    %c1_i32 = arith.constant 1 : i32
    %0 = arith.muli %arg0, %c1_i32 : i32
    %1 = arith.addi %0, %arg1 : i32
    %c0_i32 = arith.constant 0 : i32
    %2 = arith.minsi %1, %c0_i32 : i32
    %c0_i32_0 = arith.constant 0 : i32
    %c0_i32_1 = arith.constant 0 : i32
    %c0_i32_2 = arith.constant 0 : i32
    return %c0_i32_0, %2, %c0_i32_1 : i32, i32, i32
  }
  func.func @transform_1(%arg0: i32, %arg1: i32) -> (i32, i32, i32) {
    %c1_i32 = arith.constant 1 : i32
    %0 = arith.muli %arg0, %c1_i32 : i32
    %1 = arith.addi %0, %arg1 : i32
    %c0_i32 = arith.constant 0 : i32
    %2 = arith.minsi %1, %c0_i32 : i32
    %c0_i32_0 = arith.constant 0 : i32
    %c0_i32_1 = arith.constant 0 : i32
    %c0_i32_2 = arith.constant 0 : i32
    return %c0_i32_0, %2, %c0_i32_1 : i32, i32, i32
  }
  func.func @transform_2(%arg0: i32, %arg1: i32) -> (i32, i32, i32) {
    %c0_i32 = arith.constant 0 : i32
    %c0_i32_0 = arith.constant 0 : i32
    %c0_i32_1 = arith.constant 0 : i32
    return %arg0, %c0_i32, %c0_i32_0 : i32, i32, i32
  }
  func.func @transform_3(%arg0: i32, %arg1: i32) -> (i32, i32, i32) {
    %c0_i32 = arith.constant 0 : i32
    %c0_i32_0 = arith.constant 0 : i32
    %c0_i32_1 = arith.constant 0 : i32
    return %arg0, %c0_i32, %c0_i32_0 : i32, i32, i32
  }
}

</mosaic_0001>

<llo_original>
// kernel: dsc_loss.1
$region0: #{dsc_loss.1}
  #allocation0 [shape = 'u32[]', space=smem, size = 0x4, offset = 0x4, fixed_abs, tag = 'smem constant byte address 0x4 - core index']
  #allocation1 [shape = 'u32[72,128]{1,0:T(1,128)}', space=vmem, size = 0x9000, scoped, tag = 'internal scratch']
  %s0 = inlined_call_operand.vmem [shape: f32[2,8,128], index: 0, kind: input, shape index: {}]
  %s1 = inlined_call_operand.vmem [shape: f32[2,8,128], index: 1, kind: input, shape index: {}]
  %s2 = inlined_call_operand.vmem [shape: f32[1,2,128], index: 2, kind: output, shape index: {0}]
  %s3 = inlined_call_operand.vmem [shape: f32[1,2,128], index: 3, kind: output, shape index: {1}]
  %4 = xla_tuple %s2, %s3
  %s5 = sld [smem:[#allocation0]]
  $region30: #{dsc_loss.1} parent=0
    _
  %s7 = ssub.s32 1, %s5
  %s8 = scalar_select 0, %s7, %s5
  // Predicated region
  $region2: #{dsc_loss.1} parent=0 // pred_check
    _
  $region3: #{dsc_loss.1} parent=0 // pred_check_branch
    %10 = sbr.rel (0) target = $region5
  $region4: #{dsc_loss.1} parent=0 // pred_region
    %s11 = sadd.s32 0, 0
    %p12 = scmp.lt.s32.totalorder %s11, 0
    %s13 = scalar_select %p12, %s11, 0
    %p14 = scmp.lt.s32.totalorder %s13, 0
    %s15 = scalar_select %p14, %s13, 0
    %s16 = smul.addr %s15, 8
    %s17 = scalar_lea.vmem %s0, %s16
    %s18 = sadd.s32 0, 0
    %p19 = scmp.lt.s32.totalorder %s18, 0
    %s20 = scalar_select %p19, %s18, 0
  $region5: #{dsc_loss.1} parent=0 // pred_fallthru
    _
  // Predicated region
  $region6: #{dsc_loss.1} parent=0 // pred_check
    _
  $region7: #{dsc_loss.1} parent=0 // pred_check_branch
    %22 = sbr.rel (0) target = $region9
  $region8: #{dsc_loss.1} parent=0 // pred_region
    %s23 = sadd.s32 0, 0
    %p24 = scmp.lt.s32.totalorder %s23, 0
    %s25 = scalar_select %p24, %s23, 0
    %p26 = scmp.lt.s32.totalorder %s25, 0
    %s27 = scalar_select %p26, %s25, 0
    %s28 = smul.addr %s27, 8
    %s29 = scalar_lea.vmem %s1, %s28
    %s30 = sadd.s32 0, 0
    %p31 = scmp.lt.s32.totalorder %s30, 0
    %s32 = scalar_select %p31, %s30, 0
  $region9: #{dsc_loss.1} parent=0 // pred_fallthru
    _
  %s33 = sadd.s32 0, 0
  %p34 = scmp.lt.s32.totalorder %s33, 0
  %s35 = scalar_select %p34, %s33, 0
  %p36 = scmp.lt.s32.totalorder %s35, 0
  %s37 = scalar_select %p36, %s35, 0
  %s38 = smul.addr %s37, 8
  %s39 = scalar_lea.vmem %s0, %s38
  %s40 = sadd.s32 0, 0
  %p41 = scmp.lt.s32.totalorder %s40, 0
  %s42 = scalar_select %p41, %s40, 0
  %p43 = scmp.lt.s32.totalorder %s42, 0
  %s44 = scalar_select %p43, %s42, 0
  %s45 = smul.addr %s44, 8
  %s46 = scalar_lea.vmem %s1, %s45
  %s47 = sadd.s32 0, 0
  %p48 = scmp.lt.s32.totalorder %s47, 0
  %s49 = scalar_select %p48, %s47, 0
  %p50 = scmp.lt.s32.totalorder %s49, 0
  %s51 = scalar_select %p50, %s49, 0
  %s52 = smul.addr %s51, 8
  %s53 = scalar_lea.vmem %s0, %s52
  %s54 = sadd.s32 0, 0
  %p55 = scmp.lt.s32.totalorder %s54, 0
  %s56 = scalar_select %p55, %s54, 0
  %s57 = sadd.s32 0, 0
  %p58 = scmp.lt.s32.totalorder %s57, 0
  %s59 = scalar_select %p58, %s57, 0
  %p60 = scmp.lt.s32.totalorder %s59, 0
  %s61 = scalar_select %p60, %s59, 0
  %s62 = smul.addr %s61, 8
  %s63 = scalar_lea.vmem %s1, %s62
  %s64 = sadd.s32 0, 0
  %p65 = scmp.lt.s32.totalorder %s64, 0
  %s66 = scalar_select %p65, %s64, 0
  %p67 = scmp.eq.s32.totalorder 0, 0
  // Predicated region
  $region10: #{dsc_loss.1} parent=0 // pred_check
    %p68 = pneg %p67
  $region11: #{dsc_loss.1} parent=0 // pred_check_branch
    %70 = sbr.rel (%p68) target = $region13
  $region12: #{dsc_loss.1} parent=0 // pred_region
    %71 = vst [vmem:[%s2] sm:$0x3] 0.0
    %72 = vst [vmem:[%s3] sm:$0x3] 0.0
  $region13: #{dsc_loss.1} parent=0 // pred_fallthru
    _
  %v73 = vld [vmem:[%s53] sm:$0xff]
  %v74 = vld [vmem:[%s53 + $0x8] sm:$0xff]
  %v75 = vld [vmem:[%s63] sm:$0xff]
  %v76 = vld [vmem:[%s63 + $0x8] sm:$0xff]
  %v77 = vld [vmem:[%s2] sm:$0x3]
  %v78 = vmul.f32 %v73, %v75
  %v79 = vmul.f32 %v74, %v76
  %v80 = vrot.slane %v78, 4
  %v81 = vadd.f32 %v78, %v80
  %v82 = vrot.slane %v81, 2
  %v83 = vadd.f32 %v81, %v82
  %v84 = vrot.slane %v83, 1
  %v85 = vadd.f32 %v83, %v84
  %v86 = vrot.slane %v79, 4
  %v87 = vadd.f32 %v79, %v86
  %v88 = vrot.slane %v87, 2
  %v89 = vadd.f32 %v87, %v88
  %v90 = vrot.slane %v89, 1
  %v91 = vadd.f32 %v89, %v90
  %vm94 = vcmask 1041409
  %v95 = vsel %vm94, %v91, %v85
  %v97 = vadd.f32 %v77, %v95
  %98 = vst [vmem:[%s2] sm:$0x3] %v97
  %v99 = vld [vmem:[%s3] sm:$0x3]
  %v100 = vadd.f32 %v73, %v75
  %v101 = vadd.f32 %v74, %v76
  %v102 = vrot.slane %v100, 4
  %v103 = vadd.f32 %v100, %v102
  %v104 = vrot.slane %v103, 2
  %v105 = vadd.f32 %v103, %v104
  %v106 = vrot.slane %v105, 1
  %v107 = vadd.f32 %v105, %v106
  %v108 = vrot.slane %v101, 4
  %v109 = vadd.f32 %v101, %v108
  %v110 = vrot.slane %v109, 2
  %v111 = vadd.f32 %v109, %v110
  %v112 = vrot.slane %v111, 1
  %v113 = vadd.f32 %v111, %v112
  %v116 = vsel %vm94, %v113, %v107
  %v118 = vadd.f32 %v99, %v116
  %119 = vst [vmem:[%s3] sm:$0x3] %v118
  // Predicated region
  $region14: #{dsc_loss.1} parent=0 // pred_check
    _
  $region15: #{dsc_loss.1} parent=0 // pred_check_branch
    %121 = sbr.rel (0) target = $region17
  $region16: #{dsc_loss.1} parent=0 // pred_region
    _
  $region17: #{dsc_loss.1} parent=0 // pred_fallthru
    _
  // Predicated region
  $region18: #{dsc_loss.1} parent=0 // pred_check
    _
  $region19: #{dsc_loss.1} parent=0 // pred_check_branch
    %123 = sbr.rel (0) target = $region21
  $region20: #{dsc_loss.1} parent=0 // pred_region
    _
  $region21: #{dsc_loss.1} parent=0 // pred_fallthru
    _
  // Predicated region
  $region22: #{dsc_loss.1} parent=0 // pred_check
    _
  $region23: #{dsc_loss.1} parent=0 // pred_check_branch
    %125 = sbr.rel (0) target = $region25
  $region24: #{dsc_loss.1} parent=0 // pred_region
    _
  $region25: #{dsc_loss.1} parent=0 // pred_fallthru
    _
  // Predicated region
  $region26: #{dsc_loss.1} parent=0 // pred_check
    _
  $region27: #{dsc_loss.1} parent=0 // pred_check_branch
    %127 = sbr.rel (0) target = $region29
  $region28: #{dsc_loss.1} parent=0 // pred_region
    _
  $region29: #{dsc_loss.1} parent=0 // pred_fallthru
    _

</llo_original>
